<compile_context>
chip_gen: v6e
topology: v6e:2x2x1
jax: 0.10.0
libtpu: 0.0.40
codegen_flags: <defaults>
</compile_context>

<pallas_src>
import functools

import jax
import jax.numpy as jnp
from jax import lax
from jax.experimental import pallas as pl
from jax.experimental.pallas import tpu as pltpu


# ----------------------------------------------------------------------------
# Helpers
# ----------------------------------------------------------------------------
def _row_tile(m: int, max_tile: int = 512) -> int:
    """Largest row tile <= max_tile that exactly divides m (mult. of 8), else m."""
    if m <= max_tile:
        return m
    for t in range(max_tile, 7, -8):
        if m % t == 0:
            return t
    return m


def _heads_per_block(heads: int, head_dim: int) -> int:
    """Pack heads so the lane width (hp * D) is a multiple of 128 if possible."""
    if head_dim % 128 == 0:
        return 1
    hp = max(1, 128 // head_dim)
    while hp > 1 and heads % hp != 0:
        hp -= 1
    return hp


# ----------------------------------------------------------------------------
# Kernel 1: QKV projection  (row-tiled matmul, bf16 in / bf16 out, f32 acc)
# ----------------------------------------------------------------------------
def _matmul_kernel(x_ref, w_ref, o_ref):
    o_ref[...] = jnp.dot(x_ref[...], w_ref[...],
                         preferred_element_type=jnp.float32).astype(o_ref.dtype)


def qkv_projection(x2d, w):
    # x2d: (M, C) bf16, w: (C, 3*inner) bf16 -> (M, 3*inner) bf16
    M, C = x2d.shape
    Kout = w.shape[1]
    tm = _row_tile(M)
    cost = pl.CostEstimate(
        flops=2 * M * C * Kout,
        transcendentals=0,
        bytes_accessed=2 * (M * C + C * Kout + M * Kout),
    )
    return pl.pallas_call(
        _matmul_kernel,
        out_shape=jax.ShapeDtypeStruct((M, Kout), jnp.bfloat16),
        grid=(pl.cdiv(M, tm),),
        in_specs=[
            pl.BlockSpec((tm, C), lambda i: (i, 0)),
            pl.BlockSpec((C, Kout), lambda i: (0, 0)),
        ],
        out_specs=pl.BlockSpec((tm, Kout), lambda i: (i, 0)),
        compiler_params=pltpu.CompilerParams(
            dimension_semantics=("parallel",)),
        cost_estimate=cost,
    )(x2d, w)


# ----------------------------------------------------------------------------
# Kernel 2: attention core  (grid over batch x head-pair, lane-dense output)
# ----------------------------------------------------------------------------
def _attn_kernel(q_ref, k_ref, v_ref, o_ref, *rest, scale, heads_per_block,
                 head_dim, save_attn):
    arow_ref = rest[0] if save_attn else None
    outs = []
    rows = []
    for j in range(heads_per_block):
        lo = j * head_dim
        q = q_ref[:, lo:lo + head_dim]          # (N, D) bf16
        k = k_ref[:, lo:lo + head_dim]          # (N, D) bf16
        v = v_ref[:, lo:lo + head_dim]          # (N, D) bf16
        # contract last dims directly -> no explicit transpose of k
        s = lax.dot_general(q, k, (((1,), (1,)), ((), ())),
                            preferred_element_type=jnp.float32) * scale
        m = jnp.max(s, axis=-1, keepdims=True)
        p = jnp.exp(s - m)
        attn = p * pl.reciprocal(jnp.sum(p, axis=-1, keepdims=True), approx=True)
        if save_attn:
            rows.append(attn[0:1, :])           # only row 0 is ever consumed
        outs.append(jnp.dot(attn.astype(v.dtype), v,
                            preferred_element_type=jnp.float32))
    o_ref[...] = jnp.concatenate(outs, axis=-1).astype(o_ref.dtype)
    if save_attn:
        arow_ref[...] = jnp.concatenate(rows, axis=0)


def attention_core(qkv, B, N, H, D, scale, save_attn):
    # qkv: (B, N, 3*H*D) bf16 -> out: (B, N, H*D) bf16 (already 'b n (h d)')
    inner = H * D
    hp = _heads_per_block(H, D)
    nhp = H // hp
    blk = hp * D
    kernel = functools.partial(_attn_kernel, scale=scale, heads_per_block=hp,
                               head_dim=D, save_attn=save_attn)
    in_specs = [
        pl.BlockSpec((None, N, blk), lambda b, g: (b, 0, g)),             # q
        pl.BlockSpec((None, N, blk), lambda b, g: (b, 0, nhp + g)),       # k
        pl.BlockSpec((None, N, blk), lambda b, g: (b, 0, 2 * nhp + g)),   # v
    ]
    out_spec = pl.BlockSpec((None, N, blk), lambda b, g: (b, 0, g))
    out_shape = jax.ShapeDtypeStruct((B, N, inner), jnp.bfloat16)
    if save_attn:
        out_specs = (out_spec,
                     pl.BlockSpec((None, None, hp, N), lambda b, g: (b, g, 0, 0)))
        out_shapes = (out_shape,
                      jax.ShapeDtypeStruct((B, nhp, hp, N), jnp.float32))
    else:
        out_specs = out_spec
        out_shapes = out_shape
    cost = pl.CostEstimate(
        flops=4 * B * H * N * N * D,
        transcendentals=B * H * N * N,
        bytes_accessed=8 * B * N * inner + (4 * B * H * N if save_attn else 0),
    )
    res = pl.pallas_call(
        kernel,
        out_shape=out_shapes,
        grid=(B, nhp),
        in_specs=in_specs,
        out_specs=out_specs,
        compiler_params=pltpu.CompilerParams(
            dimension_semantics=("parallel", "parallel")),
        cost_estimate=cost,
    )(qkv, qkv, qkv)
    if save_attn:
        out, arow = res
        return out, arow.reshape(B, H, N)
    return res, None


# ----------------------------------------------------------------------------
# Kernel 3: output projection  (row-tiled matmul + f32 bias)
# ----------------------------------------------------------------------------
def _matmul_bias_kernel(x_ref, w_ref, b_ref, o_ref):
    acc = jnp.dot(x_ref[...], w_ref[...], preferred_element_type=jnp.float32)
    o_ref[...] = (acc + b_ref[...]).astype(o_ref.dtype)


def out_projection(x2d, w, b):
    # x2d: (M, inner) bf16, w: (inner, C) bf16, b: (1, C) f32 -> (M, C) f32
    M, Kin = x2d.shape
    C = w.shape[1]
    tm = _row_tile(M)
    cost = pl.CostEstimate(
        flops=2 * M * Kin * C,
        transcendentals=0,
        bytes_accessed=2 * (M * Kin + Kin * C) + 4 * (C + M * C),
    )
    return pl.pallas_call(
        _matmul_bias_kernel,
        out_shape=jax.ShapeDtypeStruct((M, C), jnp.float32),
        grid=(pl.cdiv(M, tm),),
        in_specs=[
            pl.BlockSpec((tm, Kin), lambda i: (i, 0)),
            pl.BlockSpec((Kin, C), lambda i: (0, 0)),
            pl.BlockSpec((1, C), lambda i: (0, 0)),
        ],
        out_specs=pl.BlockSpec((tm, C), lambda i: (i, 0)),
        compiler_params=pltpu.CompilerParams(
            dimension_semantics=("parallel",)),
        cost_estimate=cost,
    )(x2d, w, b)


# ----------------------------------------------------------------------------
# Module wrapper (mirrors Attention.forward)
# ----------------------------------------------------------------------------
class AttentionPallas:
    def __init__(self, hid_channels: int, heads: int = 8,
                 head_channels: int = 64, dropout: float = 0.0, *, key):
        inner = heads * head_channels
        self.heads = heads
        self.head_channels = head_channels
        self.hid_channels = hid_channels
        self.scale = head_channels ** (-0.5)
        self.project_out = not (heads == 1 and head_channels == hid_channels)

        k1, k2, k3 = jax.random.split(key, 3)
        # PyTorch nn.Linear weights are (out, in); store transpose, in bf16.
        bound_qkv = 1.0 / (hid_channels ** 0.5)
        self.w_qkv = jax.random.uniform(
            k1, (hid_channels, inner * 3), jnp.float32,
            minval=-bound_qkv, maxval=bound_qkv).astype(jnp.bfloat16)
        bound_out = 1.0 / (inner ** 0.5)
        self.w_out = jax.random.uniform(
            k2, (inner, hid_channels), jnp.float32,
            minval=-bound_out, maxval=bound_out).astype(jnp.bfloat16)
        self.b_out = jax.random.uniform(
            k3, (1, hid_channels), jnp.float32,
            minval=-bound_out, maxval=bound_out)

    def __call__(self, x, save_attn_matrices: bool = False):
        B, N, C = x.shape
        H, D = self.heads, self.head_channels
        inner = H * D

        xb = x.astype(jnp.bfloat16).reshape(B * N, C)
        qkv = qkv_projection(xb, self.w_qkv)              # (B*N, 3*inner) bf16
        qkv = qkv.reshape(B, N, 3 * inner)                # free reshape

        # Attention indexes q/k/v directly out of qkv; output is already
        # (B, N, H*D) lane-dense ('b n (h d)') so no transpose is needed.
        out, attn_row0 = attention_core(qkv, B, N, H, D, self.scale,
                                        save_attn_matrices)

        if self.project_out:
            out = out_projection(out.reshape(B * N, inner),
                                 self.w_out, self.b_out).reshape(B, N, C)
        else:
            out = out.astype(jnp.float32)
        # Dropout(p=0.0) == identity in eval; nothing to do.
        return out, attn_row0


# ----------------------------------------------------------------------------
# Pure-JAX reference (mirrors the kernel's bf16 matmul inputs / f32 accum)
# ----------------------------------------------------------------------------
def reference_forward(mod: AttentionPallas, x):
    B, N, C = x.shape
    H, D = mod.heads, mod.head_channels
    xb = x.astype(jnp.bfloat16)
    qkv = jnp.dot(xb, mod.w_qkv,
                  preferred_element_type=jnp.float32).astype(jnp.bfloat16)
    q, k, v = jnp.split(qkv, 3, axis=-1)

    def to_heads(t):  # 'b n (h d) -> b h n d'
        return t.reshape(B, N, H, D).transpose(0, 2, 1, 3)

    q, k, v = to_heads(q), to_heads(k), to_heads(v)
    dots = jnp.einsum("bhnd,bhmd->bhnm", q, k,
                      preferred_element_type=jnp.float32) * mod.scale
    attn = jax.nn.softmax(dots, axis=-1)
    out = jnp.einsum("bhnm,bhmd->bhnd", attn.astype(jnp.bfloat16), v,
                     preferred_element_type=jnp.float32).astype(jnp.bfloat16)
    out = out.transpose(0, 2, 1, 3).reshape(B, N, H * D)
    if mod.project_out:
        out = jnp.dot(out, mod.w_out,
                      preferred_element_type=jnp.float32) + mod.b_out
    else:
        out = out.astype(jnp.float32)
    return out, attn[:, :, 0, :]


if __name__ == "__main__":
    key = jax.random.PRNGKey(0)
    k_param, k_x = jax.random.split(key)

    B, N, hid = 2, 8, 32        # batch, seq tokens, hidden channels
    heads, head_channels = 8, 64

    mod = AttentionPallas(hid, heads=heads, head_channels=head_channels,
                          dropout=0.0, key=k_param)
    x = jax.random.normal(k_x, (B, N, hid), jnp.float32)

    out, attn_row0 = mod(x, save_attn_matrices=True)
    out = jax.block_until_ready(out)

    ref_out, ref_attn_row0 = reference_forward(mod, x)
    assert out.shape == (B, N, hid)
    assert attn_row0.shape == (B, heads, N)
    assert jnp.allclose(out, ref_out, atol=2e-2, rtol=2e-2), "output mismatch"
    assert jnp.allclose(attn_row0, ref_attn_row0, atol=2e-2, rtol=2e-2), \
        "attention-row mismatch"

    # Exercise the no-attention-matrix path (no (B,H,N,N) / row writeback).
    out2, none_attn = mod(x, save_attn_matrices=False)
    jax.block_until_ready(out2)
    assert none_attn is None
    assert jnp.allclose(out2, ref_out, atol=2e-2, rtol=2e-2)

    print("KERNEL_OK")
</pallas_src>

<mosaic_0001>
module attributes {stable_mosaic.version = 11 : i64} {
  func.func @_matmul_kernel(%arg0: i32, %arg1: memref<16x32xbf16, #tpu.memory_space<vmem>>, %arg2: memref<32x1536xbf16, #tpu.memory_space<vmem>>, %arg3: memref<16x1536xbf16, #tpu.memory_space<vmem>>) attributes {dimension_semantics = [#tpu.dimension_semantics<parallel>], iteration_bounds = array<i64: 1>, scalar_prefetch = 0 : i64, scratch_operands = 0 : i64, tpu.core_type = #tpu.core_type<tc>, window_params = [{transform_indices = @transform_0, window_bounds = array<i64: 16, 32>}, {pipeline_mode = #tpu.pipeline_mode<synchronous>, transform_indices = @transform_1, window_bounds = array<i64: 32, 1536>}, {transform_indices = @transform_2, window_bounds = array<i64: 16, 1536>}]} {
    %c0 = arith.constant 0 : index
    %c0_0 = arith.constant 0 : index
    %0 = vector.load %arg1[%c0, %c0_0] : memref<16x32xbf16, #tpu.memory_space<vmem>>, vector<16x32xbf16>
    %c0_1 = arith.constant 0 : index
    %c0_2 = arith.constant 0 : index
    %1 = vector.load %arg2[%c0_1, %c0_2] : memref<32x1536xbf16, #tpu.memory_space<vmem>>, vector<32x1536xbf16>
    %cst = arith.constant dense<0.000000e+00> : vector<16x1536xf32>
    %2 = tpu.matmul %0, %1, %cst {dimension_numbers = #tpu.dot_dimension_numbers<[1], [0], [0], [1], [0, 0, 1, 1], [], []>} : vector<16x32xbf16>, vector<32x1536xbf16>, vector<16x1536xf32> -> vector<16x1536xf32>
    %3 = arith.truncf %2 : vector<16x1536xf32> to vector<16x1536xbf16>
    %c0_3 = arith.constant 0 : index
    %c0_4 = arith.constant 0 : index
    %4 = vector.load %arg3[%c0_3, %c0_4] : memref<16x1536xbf16, #tpu.memory_space<vmem>>, vector<16x1536xbf16>
    tpu.vector_store %arg3[%c0_3, %c0_4], %3 {strides = array<i32>} : memref<16x1536xbf16, #tpu.memory_space<vmem>>, vector<16x1536xbf16>,
    return
  }
  func.func @transform_0(%arg0: i32) -> (i32, i32) {
    %c0_i32 = arith.constant 0 : i32
    %c0_i32_0 = arith.constant 0 : i32
    return %arg0, %c0_i32 : i32, i32
  }
  func.func @transform_1(%arg0: i32) -> (i32, i32) {
    %c0_i32 = arith.constant 0 : i32
    %c0_i32_0 = arith.constant 0 : i32
    %c0_i32_1 = arith.constant 0 : i32
    return %c0_i32, %c0_i32_0 : i32, i32
  }
  func.func @transform_2(%arg0: i32) -> (i32, i32) {
    %c0_i32 = arith.constant 0 : i32
    %c0_i32_0 = arith.constant 0 : i32
    return %arg0, %c0_i32 : i32, i32
  }
}

</mosaic_0001>

<llo_original>
// kernel: tpu_custom_call.1
$region0: #{tpu_custom_call.1}
  #allocation0 [shape = 'u32[]', space=smem, size = 0x4, offset = 0x4, fixed_abs, tag = 'smem constant byte address 0x4 - core index']
  #allocation1 [shape = 'u32[144,128]{1,0:T(1,128)}', space=vmem, size = 0x12000, scoped, tag = 'internal scratch']
  %s0 = inlined_call_operand.hbm [shape: bf16[16,32], index: 0, kind: input, shape index: {}]
  %s1 = inlined_call_operand.hbm [shape: bf16[32,1536], index: 1, kind: input, shape index: {}]
  %s2 = inlined_call_operand.hbm [shape: bf16[16,1536], index: 2, kind: output, shape index: {}]
  %s3 = sld [smem:[#allocation0]]
  $region26: #{tpu_custom_call.1} parent=0
    _
  %s5 = ssub.s32 1, %s3
  %s6 = scalar_select 0, %s5, %s3
  $region1: #{tpu_custom_call.1} parent=0
    #allocation2 [shape = 'u8[4096]{0}', space=vmem, size = 0x1000, scoped, tag = 'input window, operand 0, single buffered']
    #allocation3 [shape = 's32[1]{0}', space=sflag, size = 0x4, scoped, tag = 'scoped memory for tpu_custom_call.1']
    #allocation4 [shape = 's32[1]{0}', space=sflag, size = 0x4, scoped, tag = 'scoped memory for tpu_custom_call.1']
    #allocation5 [shape = 'u8[98304]{0}', space=vmem, size = 0x18000, scoped, tag = 'input window, operand 1, single buffered']
    #allocation6 [shape = 's32[1]{0}', space=sflag, size = 0x4, scoped, tag = 'scoped memory for tpu_custom_call.1']
    #allocation7 [shape = 'u8[49152]{0}', space=vmem, size = 0xc000, scoped, tag = 'output window, operand 0, single buffered']
    %7 = vsyncpa [#allocation3], 0
    %8 = vsyncpa [#allocation6], 0
    %9 = vsyncpa [#allocation4], 0
    // Predicated region
    $region2: #{tpu_custom_call.1} parent=1 // pred_check
      _
    $region3: #{tpu_custom_call.1} parent=1 // pred_check_branch
      %11 = sbr.rel (0) target = $region5
    $region4: #{tpu_custom_call.1} parent=1 // pred_region
      %s13 = ssub.s32 128, 128
      %14 = vsyncadd [#allocation3], %s13
      %s15 = sshll.u32 [#allocation2], 4
      %s16 = int_to_ptr.vmem [resolvable:$true] %s15
      %21 = dma.hbm_to_vmem [thread:$0]  %s0, 128, %s16, [#allocation3], 64, 64, 4
    $region5: #{tpu_custom_call.1} parent=1 // pred_fallthru
      _
    // Predicated region
    $region6: #{tpu_custom_call.1} parent=1 // pred_check
      _
    $region7: #{tpu_custom_call.1} parent=1 // pred_check_branch
      %23 = sbr.rel (0) target = $region9
    $region8: #{tpu_custom_call.1} parent=1 // pred_region
      %s25 = ssub.s32 3072, 3072
      %26 = vsyncadd [#allocation6], %s25
      %s27 = sshll.u32 [#allocation5], 4
      %s28 = int_to_ptr.vmem [resolvable:$true] %s27
      %33 = dma.hbm_to_vmem [thread:$0]  %s1, 3072, %s28, [#allocation6], 768, 768, 48
    $region9: #{tpu_custom_call.1} parent=1 // pred_fallthru
      _
    // Predicated region
    $region10: #{tpu_custom_call.1} parent=1 // pred_check
      _
    $region11: #{tpu_custom_call.1} parent=1 // pred_check_branch
      %35 = sbr.rel (0) target = $region13
    $region12: #{tpu_custom_call.1} parent=1 // pred_region
      %36 = dma.done [#allocation3], 128
    $region13: #{tpu_custom_call.1} parent=1 // pred_fallthru
      _
    // Predicated region
    $region14: #{tpu_custom_call.1} parent=1 // pred_check
      _
    $region15: #{tpu_custom_call.1} parent=1 // pred_check_branch
      %38 = sbr.rel (0) target = $region17
    $region16: #{tpu_custom_call.1} parent=1 // pred_region
      %39 = dma.done [#allocation6], 3072
    $region17: #{tpu_custom_call.1} parent=1 // pred_fallthru
      _
    %v41 = vld [vmem:[#allocation2] sm:$0xf]
    %v42 = vld [vmem:[#allocation2 + $0x4] sm:$0xf]
    %v43 = vld [vmem:[#allocation5] sm:$0xff]
    %v44 = vld [vmem:[#allocation5 + $0x8] sm:$0xff]
    %v45 = vld [vmem:[#allocation5 + $0x10] sm:$0xff]
    %v46 = vld [vmem:[#allocation5 + $0x18] sm:$0xff]
    %v47 = vld [vmem:[#allocation5 + $0x20] sm:$0xff]
    %v48 = vld [vmem:[#allocation5 + $0x28] sm:$0xff]
    %v49 = vld [vmem:[#allocation5 + $0x30] sm:$0xff]
    %v50 = vld [vmem:[#allocation5 + $0x38] sm:$0xff]
    %v51 = vld [vmem:[#allocation5 + $0x40] sm:$0xff]
    %v52 = vld [vmem:[#allocation5 + $0x48] sm:$0xff]
    %v53 = vld [vmem:[#allocation5 + $0x50] sm:$0xff]
    %v54 = vld [vmem:[#allocation5 + $0x58] sm:$0xff]
    %v55 = vld [vmem:[#allocation5 + $0x60] sm:$0xff]
    %v56 = vld [vmem:[#allocation5 + $0x68] sm:$0xff]
    %v57 = vld [vmem:[#allocation5 + $0x70] sm:$0xff]
    %v58 = vld [vmem:[#allocation5 + $0x78] sm:$0xff]
    %v59 = vld [vmem:[#allocation5 + $0x80] sm:$0xff]
    %v60 = vld [vmem:[#allocation5 + $0x88] sm:$0xff]
    %v61 = vld [vmem:[#allocation5 + $0x90] sm:$0xff]
    %v62 = vld [vmem:[#allocation5 + $0x98] sm:$0xff]
    %v63 = vld [vmem:[#allocation5 + $0xa0] sm:$0xff]
    %v64 = vld [vmem:[#allocation5 + $0xa8] sm:$0xff]
    %v65 = vld [vmem:[#allocation5 + $0xb0] sm:$0xff]
    %v66 = vld [vmem:[#allocation5 + $0xb8] sm:$0xff]
    %v69 = vunpack.c.l.b16 %v41
    %v70 = vunpack.c.l.b16 %v42
    %v71 = vpack.c.b16 %v70, %v69
    %v96 = vunpack.c.l.b16 %v43
    %v97 = vunpack.c.h.b16 %v43
    %v98 = vunpack.c.l.b16 %v44
    %v99 = vunpack.c.h.b16 %v44
    %v100 = vunpack.c.l.b16 %v45
    %v101 = vunpack.c.h.b16 %v45
    %v102 = vunpack.c.l.b16 %v46
    %v103 = vunpack.c.h.b16 %v46
    %v104 = vunpack.c.l.b16 %v47
    %v105 = vunpack.c.h.b16 %v47
    %v106 = vunpack.c.l.b16 %v48
    %v107 = vunpack.c.h.b16 %v48
    %v108 = vunpack.c.l.b16 %v49
    %v109 = vunpack.c.h.b16 %v49
    %v110 = vunpack.c.l.b16 %v50
    %v111 = vunpack.c.h.b16 %v50
    %v112 = vunpack.c.l.b16 %v51
    %v113 = vunpack.c.h.b16 %v51
    %v114 = vunpack.c.l.b16 %v52
    %v115 = vunpack.c.h.b16 %v52
    %v116 = vunpack.c.l.b16 %v53
    %v117 = vunpack.c.h.b16 %v53
    %v118 = vunpack.c.l.b16 %v54
    %v119 = vunpack.c.h.b16 %v54
    %v120 = vunpack.c.l.b16 %v55
    %v121 = vunpack.c.h.b16 %v55
    %v122 = vunpack.c.l.b16 %v56
    %v123 = vunpack.c.h.b16 %v56
    %v124 = vunpack.c.l.b16 %v57
    %v125 = vunpack.c.h.b16 %v57
    %v126 = vunpack.c.l.b16 %v58
    %v127 = vunpack.c.h.b16 %v58
    %v128 = vunpack.c.l.b16 %v59
    %v129 = vunpack.c.h.b16 %v59
    %v130 = vunpack.c.l.b16 %v60
    %v131 = vunpack.c.h.b16 %v60
    %v132 = vunpack.c.l.b16 %v61
    %v133 = vunpack.c.h.b16 %v61
    %v134 = vunpack.c.l.b16 %v62
    %v135 = vunpack.c.h.b16 %v62
    %v136 = vunpack.c.l.b16 %v63
    %v137 = vunpack.c.h.b16 %v63
    %v138 = vunpack.c.l.b16 %v64
    %v139 = vunpack.c.h.b16 %v64
    %v140 = vunpack.c.l.b16 %v65
    %v141 = vunpack.c.h.b16 %v65
    %v142 = vunpack.c.l.b16 %v66
    %v143 = vunpack.c.h.b16 %v66
    %v144 = vpack.c.b16 %v108, %v96
    %v145 = vpack.c.b16 %v109, %v97
    %v146 = vpack.c.b16 %v110, %v98
    %v147 = vpack.c.b16 %v111, %v99
    %v148 = vpack.c.b16 %v112, %v100
    %v149 = vpack.c.b16 %v113, %v101
    %v150 = vpack.c.b16 %v114, %v102
    %v151 = vpack.c.b16 %v115, %v103
    %v152 = vpack.c.b16 %v116, %v104
    %v153 = vpack.c.b16 %v117, %v105
    %v154 = vpack.c.b16 %v118, %v106
    %v155 = vpack.c.b16 %v119, %v107
    %v156 = vpack.c.b16 %v132, %v120
    %v157 = vpack.c.b16 %v133, %v121
    %v158 = vpack.c.b16 %v134, %v122
    %v159 = vpack.c.b16 %v135, %v123
    %v160 = vpack.c.b16 %v136, %v124
    %v161 = vpack.c.b16 %v137, %v125
    %v162 = vpack.c.b16 %v138, %v126
    %v163 = vpack.c.b16 %v139, %v127
    %v164 = vpack.c.b16 %v140, %v128
    %v165 = vpack.c.b16 %v141, %v129
    %v166 = vpack.c.b16 %v142, %v130
    %v167 = vpack.c.b16 %v143, %v131
    %vm192 = vcmask 261120
    %v194 = vsel %vm192, %v71, 0
    %196 = vmatprep.subr.bf16.mxu0 0
    %197 = vmatpush1.bf16.msra.mxu0 0
    %198 = vmatprep.subr.bf16.mxu0 0
    %199 = vmatpush1.bf16.msra.mxu0 0
    %200 = vmatprep.subr.bf16.mxu0 0
    %201 = vmatpush1.bf16.msra.mxu0 0
    %202 = vmatprep.subr.bf16.mxu0 0
    %203 = vmatpush1.bf16.msra.mxu0 0
    %204 = vmatprep.subr.bf16.mxu0 0
    %205 = vmatpush1.bf16.msra.mxu0 0
    %206 = vmatprep.subr.bf16.mxu0 0
    %207 = vmatpush1.bf16.msra.mxu0 0
    %208 = vmatprep.subr.bf16.mxu0 %v157
    %209 = vmatpush1.bf16.msra.mxu0 %v156
    %210 = vmatprep.subr.bf16.mxu0 %v145
    %211 = vmatpush1.bf16.msra.mxu0 %v144
    %212 = vmatprep.subr.bf16.mxu0 0
    %213 = vmatpush2.bf16.msra.mxu0 0
    %214 = vmatprep.subr.bf16.mxu0 0
    %215 = vmatpush2.bf16.msra.mxu0 0
    %216 = vmatprep.subr.bf16.mxu0 0
    %217 = vmatpush2.bf16.msra.mxu0 0
    %218 = vmatprep.subr.bf16.mxu0 0
    %219 = vmatpush2.bf16.msra.mxu0 0
    %220 = vmatprep.subr.bf16.mxu0 0
    %221 = vmatpush2.bf16.msra.mxu0 0
    %222 = vmatprep.subr.bf16.mxu0 0
    %223 = vmatpush2.bf16.msra.mxu0 0
    %224 = vmatprep.subr.bf16.mxu0 0
    %225 = vmatpush2.bf16.msra.mxu0 0
    %226 = vmatprep.subr.bf16.mxu0 0
    %227 = vmatpush2.bf16.msra.mxu0 0
    %228 = vmatprep.mubr.bf16.mxu0 0
    %229 = vmatmul.mubr.bf16.gmra.mxu0 %v194
    %v230 = vpop.f32.mrf.mxu0
    %v231 = vadd.f32 0.0, %v230
    %v232 = vpop.f32.mrf.mxu0
    %v233 = vadd.f32 0.0, %v232
    %v234 = vpop.f32.mrf.mxu0
    %v235 = vadd.f32 0.0, %v234
    %v236 = vpop.f32.mrf.mxu0
    %v237 = vadd.f32 0.0, %v236
    %238 = vdwg.mxu0
    %239 = vmatprep.subr.bf16.mxu0 0
    %240 = vmatpush1.bf16.msra.mxu0 0
    %241 = vmatprep.subr.bf16.mxu0 0
    %242 = vmatpush1.bf16.msra.mxu0 0
    %243 = vmatprep.subr.bf16.mxu0 0
    %244 = vmatpush1.bf16.msra.mxu0 0
    %245 = vmatprep.subr.bf16.mxu0 0
    %246 = vmatpush1.bf16.msra.mxu0 0
    %247 = vmatprep.subr.bf16.mxu0 0
    %248 = vmatpush1.bf16.msra.mxu0 0
    %249 = vmatprep.subr.bf16.mxu0 0
    %250 = vmatpush1.bf16.msra.mxu0 0
    %251 = vmatprep.subr.bf16.mxu0 %v159
    %252 = vmatpush1.bf16.msra.mxu0 %v158
    %253 = vmatprep.subr.bf16.mxu0 %v147
    %254 = vmatpush1.bf16.msra.mxu0 %v146
    %255 = vmatprep.subr.bf16.mxu0 0
    %256 = vmatpush2.bf16.msra.mxu0 0
    %257 = vmatprep.subr.bf16.mxu0 0
    %258 = vmatpush2.bf16.msra.mxu0 0
    %259 = vmatprep.subr.bf16.mxu0 0
    %260 = vmatpush2.bf16.msra.mxu0 0
    %261 = vmatprep.subr.bf16.mxu0 0
    %262 = vmatpush2.bf16.msra.mxu0 0
    %263 = vmatprep.subr.bf16.mxu0 0
    %264 = vmatpush2.bf16.msra.mxu0 0
    %265 = vmatprep.subr.bf16.mxu0 0
    %266 = vmatpush2.bf16.msra.mxu0 0
    %267 = vmatprep.subr.bf16.mxu0 0
    %268 = vmatpush2.bf16.msra.mxu0 0
    %269 = vmatprep.subr.bf16.mxu0 0
    %270 = vmatpush2.bf16.msra.mxu0 0
    %271 = vmatprep.mubr.bf16.mxu0 0
    %272 = vmatmul.mubr.bf16.gmra.mxu0 %v194
    %v273 = vpop.f32.mrf.mxu0
    %v274 = vadd.f32 0.0, %v273
    %v275 = vpop.f32.mrf.mxu0
    %v276 = vadd.f32 0.0, %v275
    %v277 = vpop.f32.mrf.mxu0
    %v278 = vadd.f32 0.0, %v277
    %v279 = vpop.f32.mrf.mxu0
    %v280 = vadd.f32 0.0, %v279
    %281 = vdwg.mxu0
    %282 = vmatprep.subr.bf16.mxu0 0
    %283 = vmatpush1.bf16.msra.mxu0 0
    %284 = vmatprep.subr.bf16.mxu0 0
    %285 = vmatpush1.bf16.msra.mxu0 0
    %286 = vmatprep.subr.bf16.mxu0 0
    %287 = vmatpush1.bf16.msra.mxu0 0
    %288 = vmatprep.subr.bf16.mxu0 0
    %289 = vmatpush1.bf16.msra.mxu0 0
    %290 = vmatprep.subr.bf16.mxu0 0
    %291 = vmatpush1.bf16.msra.mxu0 0
    %292 = vmatprep.subr.bf16.mxu0 0
    %293 = vmatpush1.bf16.msra.mxu0 0
    %294 = vmatprep.subr.bf16.mxu0 %v161
    %295 = vmatpush1.bf16.msra.mxu0 %v160
    %296 = vmatprep.subr.bf16.mxu0 %v149
    %297 = vmatpush1.bf16.msra.mxu0 %v148
    %298 = vmatprep.subr.bf16.mxu0 0
    %299 = vmatpush2.bf16.msra.mxu0 0
    %300 = vmatprep.subr.bf16.mxu0 0
    %301 = vmatpush2.bf16.msra.mxu0 0
    %302 = vmatprep.subr.bf16.mxu0 0
    %303 = vmatpush2.bf16.msra.mxu0 0
    %304 = vmatprep.subr.bf16.mxu0 0
    %305 = vmatpush2.bf16.msra.mxu0 0
    %306 = vmatprep.subr.bf16.mxu0 0
    %307 = vmatpush2.bf16.msra.mxu0 0
    %308 = vmatprep.subr.bf16.mxu0 0
    %309 = vmatpush2.bf16.msra.mxu0 0
    %310 = vmatprep.subr.bf16.mxu0 0
    %311 = vmatpush2.bf16.msra.mxu0 0
    %312 = vmatprep.subr.bf16.mxu0 0
    %313 = vmatpush2.bf16.msra.mxu0 0
    %314 = vmatprep.mubr.bf16.mxu0 0
    %315 = vmatmul.mubr.bf16.gmra.mxu0 %v194
    %v316 = vpop.f32.mrf.mxu0
    %v317 = vadd.f32 0.0, %v316
    %v318 = vpop.f32.mrf.mxu0
    %v319 = vadd.f32 0.0, %v318
    %v320 = vpop.f32.mrf.mxu0
    %v321 = vadd.f32 0.0, %v320
    %v322 = vpop.f32.mrf.mxu0
    %v323 = vadd.f32 0.0, %v322
    %324 = vdwg.mxu0
    %325 = vmatprep.subr.bf16.mxu0 0
    %326 = vmatpush1.bf16.msra.mxu0 0
    %327 = vmatprep.subr.bf16.mxu0 0
    %328 = vmatpush1.bf16.msra.mxu0 0
    %329 = vmatprep.subr.bf16.mxu0 0
    %330 = vmatpush1.bf16.msra.mxu0 0
    %331 = vmatprep.subr.bf16.mxu0 0
    %332 = vmatpush1.bf16.msra.mxu0 0
    %333 = vmatprep.subr.bf16.mxu0 0
    %334 = vmatpush1.bf16.msra.mxu0 0
    %335 = vmatprep.subr.bf16.mxu0 0
    %336 = vmatpush1.bf16.msra.mxu0 0
    %337 = vmatprep.subr.bf16.mxu0 %v163
    %338 = vmatpush1.bf16.msra.mxu0 %v162
    %339 = vmatprep.subr.bf16.mxu0 %v151
    %340 = vmatpush1.bf16.msra.mxu0 %v150
    %341 = vmatprep.subr.bf16.mxu0 0
    %342 = vmatpush2.bf16.msra.mxu0 0
    %343 = vmatprep.subr.bf16.mxu0 0
    %344 = vmatpush2.bf16.msra.mxu0 0
    %345 = vmatprep.subr.bf16.mxu0 0
    %346 = vmatpush2.bf16.msra.mxu0 0
    %347 = vmatprep.subr.bf16.mxu0 0
    %348 = vmatpush2.bf16.msra.mxu0 0
    %349 = vmatprep.subr.bf16.mxu0 0
    %350 = vmatpush2.bf16.msra.mxu0 0
    %351 = vmatprep.subr.bf16.mxu0 0
    %352 = vmatpush2.bf16.msra.mxu0 0
    %353 = vmatprep.subr.bf16.mxu0 0
    %354 = vmatpush2.bf16.msra.mxu0 0
    %355 = vmatprep.subr.bf16.mxu0 0
    %356 = vmatpush2.bf16.msra.mxu0 0
    %357 = vmatprep.mubr.bf16.mxu0 0
    %358 = vmatmul.mubr.bf16.gmra.mxu0 %v194
    %v359 = vpop.f32.mrf.mxu0
    %v360 = vadd.f32 0.0, %v359
    %v361 = vpop.f32.mrf.mxu0
    %v362 = vadd.f32 0.0, %v361
    %v363 = vpop.f32.mrf.mxu0
    %v364 = vadd.f32 0.0, %v363
    %v365 = vpop.f32.mrf.mxu0
    %v366 = vadd.f32 0.0, %v365
    %367 = vdwg.mxu0
    %368 = vmatprep.subr.bf16.mxu0 0
    %369 = vmatpush1.bf16.msra.mxu0 0
    %370 = vmatprep.subr.bf16.mxu0 0
    %371 = vmatpush1.bf16.msra.mxu0 0
    %372 = vmatprep.subr.bf16.mxu0 0
    %373 = vmatpush1.bf16.msra.mxu0 0
    %374 = vmatprep.subr.bf16.mxu0 0
    %375 = vmatpush1.bf16.msra.mxu0 0
    %376 = vmatprep.subr.bf16.mxu0 0
    %377 = vmatpush1.bf16.msra.mxu0 0
    %378 = vmatprep.subr.bf16.mxu0 0
    %379 = vmatpush1.bf16.msra.mxu0 0
    %380 = vmatprep.subr.bf16.mxu0 %v165
    %381 = vmatpush1.bf16.msra.mxu0 %v164
    %382 = vmatprep.subr.bf16.mxu0 %v153
    %383 = vmatpush1.bf16.msra.mxu0 %v152
    %384 = vmatprep.subr.bf16.mxu0 0
    %385 = vmatpush2.bf16.msra.mxu0 0
    %386 = vmatprep.subr.bf16.mxu0 0
    %387 = vmatpush2.bf16.msra.mxu0 0
    %388 = vmatprep.subr.bf16.mxu0 0
    %389 = vmatpush2.bf16.msra.mxu0 0
    %390 = vmatprep.subr.bf16.mxu0 0
    %391 = vmatpush2.bf16.msra.mxu0 0
    %392 = vmatprep.subr.bf16.mxu0 0
    %393 = vmatpush2.bf16.msra.mxu0 0
    %394 = vmatprep.subr.bf16.mxu0 0
    %395 = vmatpush2.bf16.msra.mxu0 0
    %396 = vmatprep.subr.bf16.mxu0 0
    %397 = vmatpush2.bf16.msra.mxu0 0
    %398 = vmatprep.subr.bf16.mxu0 0
    %399 = vmatpush2.bf16.msra.mxu0 0
    %400 = vmatprep.mubr.bf16.mxu0 0
    %401 = vmatmul.mubr.bf16.gmra.mxu0 %v194
    %v402 = vpop.f32.mrf.mxu0
    %v403 = vadd.f32 0.0, %v402
    %v404 = vpop.f32.mrf.mxu0
    %v405 = vadd.f32 0.0, %v404
    %v406 = vpop.f32.mrf.mxu0
    %v407 = vadd.f32 0.0, %v406
    %v408 = vpop.f32.mrf.mxu0
    %v409 = vadd.f32 0.0, %v408
    %410 = vdwg.mxu0
    %411 = vmatprep.subr.bf16.mxu0 0
    %412 = vmatpush1.bf16.msra.mxu0 0
    %413 = vmatprep.subr.bf16.mxu0 0
    %414 = vmatpush1.bf16.msra.mxu0 0
    %415 = vmatprep.subr.bf16.mxu0 0
    %416 = vmatpush1.bf16.msra.mxu0 0
    %417 = vmatprep.subr.bf16.mxu0 0
    %418 = vmatpush1.bf16.msra.mxu0 0
    %419 = vmatprep.subr.bf16.mxu0 0
    %420 = vmatpush1.bf16.msra.mxu0 0
    %421 = vmatprep.subr.bf16.mxu0 0
    %422 = vmatpush1.bf16.msra.mxu0 0
    %423 = vmatprep.subr.bf16.mxu0 %v167
    %424 = vmatpush1.bf16.msra.mxu0 %v166
    %425 = vmatprep.subr.bf16.mxu0 %v155
    %426 = vmatpush1.bf16.msra.mxu0 %v154
    %427 = vmatprep.subr.bf16.mxu0 0
    %428 = vmatpush2.bf16.msra.mxu0 0
    %429 = vmatprep.subr.bf16.mxu0 0
    %430 = vmatpush2.bf16.msra.mxu0 0
    %431 = vmatprep.subr.bf16.mxu0 0
    %432 = vmatpush2.bf16.msra.mxu0 0
    %433 = vmatprep.subr.bf16.mxu0 0
    %434 = vmatpush2.bf16.msra.mxu0 0
    %435 = vmatprep.subr.bf16.mxu0 0
    %436 = vmatpush2.bf16.msra.mxu0 0
    %437 = vmatprep.subr.bf16.mxu0 0
    %438 = vmatpush2.bf16.msra.mxu0 0
    %439 = vmatprep.subr.bf16.mxu0 0
    %440 = vmatpush2.bf16.msra.mxu0 0
    %441 = vmatprep.subr.bf16.mxu0 0
    %442 = vmatpush2.bf16.msra.mxu0 0
    %443 = vmatprep.mubr.bf16.mxu0 0
    %444 = vmatmul.mubr.bf16.gmra.mxu0 %v194
    %v445 = vpop.f32.mrf.mxu0
    %v446 = vadd.f32 0.0, %v445
    %v447 = vpop.f32.mrf.mxu0
    %v448 = vadd.f32 0.0, %v447
    %v449 = vpop.f32.mrf.mxu0
    %v450 = vadd.f32 0.0, %v449
    %v451 = vpop.f32.mrf.mxu0
    %v452 = vadd.f32 0.0, %v451
    %453 = vdwg.mxu0
    %v454 = vpack.c.bf16 %v235, %v231
    %v455 = vpack.c.bf16 %v237, %v233
    %v456 = vpack.c.bf16 %v278, %v274
    %v457 = vpack.c.bf16 %v280, %v276
    %v458 = vpack.c.bf16 %v321, %v317
    %v459 = vpack.c.bf16 %v323, %v319
    %v460 = vpack.c.bf16 %v364, %v360
    %v461 = vpack.c.bf16 %v366, %v362
    %v462 = vpack.c.bf16 %v407, %v403
    %v463 = vpack.c.bf16 %v409, %v405
    %v464 = vpack.c.bf16 %v450, %v446
    %v465 = vpack.c.bf16 %v452, %v448
    %v478 = vunpack.c.l.b16 %v454
    %v479 = vunpack.c.l.b16 %v455
    %v480 = vunpack.c.l.b16 %v456
    %v481 = vunpack.c.l.b16 %v457
    %v482 = vunpack.c.l.b16 %v458
    %v483 = vunpack.c.l.b16 %v459
    %v484 = vunpack.c.l.b16 %v460
    %v485 = vunpack.c.l.b16 %v461
    %v486 = vunpack.c.l.b16 %v462
    %v487 = vunpack.c.l.b16 %v463
    %v488 = vunpack.c.l.b16 %v464
    %v489 = vunpack.c.l.b16 %v465
    %v490 = vunpack.c.h.b16 %v454
    %v491 = vunpack.c.h.b16 %v455
    %v492 = vunpack.c.h.b16 %v456
    %v493 = vunpack.c.h.b16 %v457
    %v494 = vunpack.c.h.b16 %v458
    %v495 = vunpack.c.h.b16 %v459
    %v496 = vunpack.c.h.b16 %v460
    %v497 = vunpack.c.h.b16 %v461
    %v498 = vunpack.c.h.b16 %v462
    %v499 = vunpack.c.h.b16 %v463
    %v500 = vunpack.c.h.b16 %v464
    %v501 = vunpack.c.h.b16 %v465
    %v502 = vpack.c.b16 %v479, %v478
    %v503 = vpack.c.b16 %v481, %v480
    %v504 = vpack.c.b16 %v483, %v482
    %v505 = vpack.c.b16 %v485, %v484
    %v506 = vpack.c.b16 %v487, %v486
    %v507 = vpack.c.b16 %v489, %v488
    %v508 = vpack.c.b16 %v491, %v490
    %v509 = vpack.c.b16 %v493, %v492
    %v510 = vpack.c.b16 %v495, %v494
    %v511 = vpack.c.b16 %v497, %v496
    %v512 = vpack.c.b16 %v499, %v498
    %v513 = vpack.c.b16 %v501, %v500
    %526 = vst [vmem:[#allocation7] sm:$0xff] %v502
    %527 = vst [vmem:[#allocation7 + $0x8] sm:$0xff] %v503
    %528 = vst [vmem:[#allocation7 + $0x10] sm:$0xff] %v504
    %529 = vst [vmem:[#allocation7 + $0x18] sm:$0xff] %v505
    %530 = vst [vmem:[#allocation7 + $0x20] sm:$0xff] %v506
    %531 = vst [vmem:[#allocation7 + $0x28] sm:$0xff] %v507
    %532 = vst [vmem:[#allocation7 + $0x30] sm:$0xff] %v508
    %533 = vst [vmem:[#allocation7 + $0x38] sm:$0xff] %v509
    %534 = vst [vmem:[#allocation7 + $0x40] sm:$0xff] %v510
    %535 = vst [vmem:[#allocation7 + $0x48] sm:$0xff] %v511
    %536 = vst [vmem:[#allocation7 + $0x50] sm:$0xff] %v512
    %537 = vst [vmem:[#allocation7 + $0x58] sm:$0xff] %v513
    // Predicated region
    $region18: #{tpu_custom_call.1} parent=1 // pred_check
      _
    $region19: #{tpu_custom_call.1} parent=1 // pred_check_branch
      %539 = sbr.rel (0) target = $region21
    $region20: #{tpu_custom_call.1} parent=1 // pred_region
      %s541 = ssub.s32 1536, 1536
      %542 = vsyncadd [#allocation4], %s541
      %s543 = sshll.u32 [#allocation7], 4
      %s544 = int_to_ptr.vmem [resolvable:$true] %s543
      %549 = dma.vmem_to_hbm [thread:$0]  %s544, 1536, %s2, [#allocation4], 768, 768, 48
    $region21: #{tpu_custom_call.1} parent=1 // pred_fallthru
      _
    // Predicated region
    $region22: #{tpu_custom_call.1} parent=1 // pred_check
      _
    $region23: #{tpu_custom_call.1} parent=1 // pred_check_branch
      %551 = sbr.rel (0) target = $region25
    $region24: #{tpu_custom_call.1} parent=1 // pred_region
      %552 = dma.done [#allocation4], 1536
    $region25: #{tpu_custom_call.1} parent=1 // pred_fallthru
      _
    %553 = vsyncpa [#allocation3], 1
    %554 = vsyncpa [#allocation6], 1
    %555 = vsyncpa [#allocation4], 1

</llo_original>
